<compile_context>
chip_gen: v7x
topology: tpu7x:2x2x1
jax: 0.10.0
libtpu: 0.0.40
codegen_flags: <defaults>
</compile_context>

<pallas_src>
import math

import jax
import jax.numpy as jnp
from jax.experimental import pallas as pl
from jax.experimental.pallas import tpu as pltpu


def _build_pe(max_len: int, d_model: int) -> jnp.ndarray:
    """Deterministic sinusoidal table, identical to the PyTorch __init__ (even d_model)."""
    position = jnp.arange(0, max_len, dtype=jnp.float32)[:, None]               # (max_len, 1)
    div_term = jnp.exp(
        jnp.arange(0, d_model, 2, dtype=jnp.float32) * (-math.log(10000.0) / d_model)
    )                                                                            # (ceil(D/2),)
    angles = position * div_term                                                 # (max_len, ceil(D/2))
    pe = jnp.zeros((max_len, d_model), dtype=jnp.float32)
    pe = pe.at[:, 0::2].set(jnp.sin(angles))
    # For even d_model this is exactly the PyTorch recipe; for odd d_model the
    # extra cos column is dropped (PyTorch itself errors for odd d_model).
    pe = pe.at[:, 1::2].set(jnp.cos(angles[:, : d_model // 2]))
    return pe                                                                    # (max_len, d_model)


# ~2 MiB per block buffer: with x-in, out (double-buffered) and the tiny pe row,
# total live VMEM stays well under v5e's 16 MiB default scoped limit.
_MAX_BLOCK_BYTES = 2 * 1024 * 1024


def _choose_tiles(num_rows: int, num_cols: int, itemsize: int):
    """Pick (row_tile, col_tile) for a (num_rows, num_cols) elementwise kernel."""
    budget = _MAX_BLOCK_BYTES // itemsize  # elements per block
    if num_rows * num_cols <= budget:
        # Whole array fits in one block.
        return num_rows, num_cols
    if num_cols <= budget and num_cols * min(num_rows, 8) <= budget:
        # Full rows fit: keep the row lane-dense and tile over rows.
        tc = num_cols
        rows_fit = budget // num_cols
        tr = num_rows if num_rows <= rows_fit else max(8, (rows_fit // 8) * 8)
    else:
        # Rows too wide: tile columns in multiples of 128, few rows per block.
        tr = num_rows if num_rows < 8 else 8
        tc = max(128, (budget // tr) // 128 * 128)
    return tr, tc


def _pe_add_kernel(x_ref, pe_ref, o_ref):
    # x_ref: (tr, tc) tile of the flattened activations.
    # pe_ref: (1, tc) tile of the flattened PE row, broadcast over rows.
    o_ref[...] = (x_ref[...] + pe_ref[...]).astype(o_ref.dtype)


def positional_encoding(x: jnp.ndarray, pe_full: jnp.ndarray) -> jnp.ndarray:
    """x: (B, S, D); pe_full: (max_len, D) float32. Returns x + pe[:S] (broadcast over B)."""
    B, S, D = x.shape
    max_len, d_model = pe_full.shape
    assert d_model == D, f"d_model mismatch: pe has {d_model}, x has {D}"
    assert S <= max_len, f"sequence length {S} exceeds positional-encoding max_len {max_len}"

    # Flatten to a lane-dense 2-D view: rows = batch, cols = S*D (contiguous, so
    # the reshapes are free bitcasts).  pe broadcasts over batch, so a single
    # flattened row of length S*D covers every row tile.
    R, C = B, S * D
    x2 = x.reshape(R, C)
    pe_row = pe_full[:S, :].reshape(1, C)   # tiny (S*D) f32 row

    tr, tc = _choose_tiles(R, C, x2.dtype.itemsize)
    grid = (pl.cdiv(R, tr), pl.cdiv(C, tc))

    out2 = pl.pallas_call(
        _pe_add_kernel,
        out_shape=jax.ShapeDtypeStruct((R, C), x.dtype),
        grid_spec=pltpu.PrefetchScalarGridSpec(
            num_scalar_prefetch=0,
            grid=grid,
            in_specs=[
                pl.BlockSpec((tr, tc), lambda i, j: (i, j)),   # x tile
                pl.BlockSpec((1, tc), lambda i, j: (0, j)),    # pe row tile (shared across rows)
            ],
            out_specs=pl.BlockSpec((tr, tc), lambda i, j: (i, j)),
        ),
        compiler_params=pltpu.CompilerParams(
            dimension_semantics=("parallel", "parallel"),
        ),
    )(x2, pe_row)

    return out2.reshape(B, S, D)


if __name__ == "__main__":
    d_model = 32
    max_len = 41
    B, S = 2, 8

    key = jax.random.PRNGKey(0)
    x = jax.random.normal(key, (B, S, d_model), dtype=jnp.float32)

    pe_full = _build_pe(max_len, d_model)

    out = positional_encoding(x, pe_full)
    out = jax.block_until_ready(out)

    # Correctness check against plain-JAX reference.
    ref = x + pe_full[None, :S, :]
    assert out.shape == (B, S, d_model)
    assert jnp.allclose(out, ref, atol=1e-6), "mismatch vs reference"

    print("KERNEL_OK")
</pallas_src>

<mosaic_0001>
module attributes {stable_mosaic.version = 11 : i64} {
  func.func @_pe_add_kernel(%arg0: i32, %arg1: i32, %arg2: memref<2x256xf32, #tpu.memory_space<vmem>>, %arg3: memref<1x256xf32, #tpu.memory_space<vmem>>, %arg4: memref<2x256xf32, #tpu.memory_space<vmem>>) attributes {dimension_semantics = [#tpu.dimension_semantics<parallel>, #tpu.dimension_semantics<parallel>], iteration_bounds = array<i64: 1, 1>, scalar_prefetch = 0 : i64, scratch_operands = 0 : i64, tpu.core_type = #tpu.core_type<tc>, window_params = [{transform_indices = @transform_0, window_bounds = array<i64: 2, 256>}, {transform_indices = @transform_1, window_bounds = array<i64: 1, 256>}, {transform_indices = @transform_2, window_bounds = array<i64: 2, 256>}]} {
    %c0 = arith.constant 0 : index
    %c0_0 = arith.constant 0 : index
    %0 = vector.load %arg2[%c0, %c0_0] : memref<2x256xf32, #tpu.memory_space<vmem>>, vector<2x256xf32>
    %c0_1 = arith.constant 0 : index
    %c0_2 = arith.constant 0 : index
    %1 = vector.load %arg3[%c0_1, %c0_2] : memref<1x256xf32, #tpu.memory_space<vmem>>, vector<1x256xf32>
    %2 = vector.broadcast %1 : vector<1x256xf32> to vector<2x256xf32>
    %3 = arith.addf %0, %2 : vector<2x256xf32>
    %c0_3 = arith.constant 0 : index
    %c0_4 = arith.constant 0 : index
    %4 = vector.load %arg4[%c0_3, %c0_4] : memref<2x256xf32, #tpu.memory_space<vmem>>, vector<2x256xf32>
    tpu.vector_store %arg4[%c0_3, %c0_4], %3 {strides = array<i32>} : memref<2x256xf32, #tpu.memory_space<vmem>>, vector<2x256xf32>,
    return
  }
  func.func @transform_0(%arg0: i32, %arg1: i32) -> (i32, i32) {
    %c0_i32 = arith.constant 0 : i32
    return %arg0, %arg1 : i32, i32
  }
  func.func @transform_1(%arg0: i32, %arg1: i32) -> (i32, i32) {
    %c0_i32 = arith.constant 0 : i32
    %c0_i32_0 = arith.constant 0 : i32
    return %c0_i32, %arg1 : i32, i32
  }
  func.func @transform_2(%arg0: i32, %arg1: i32) -> (i32, i32) {
    %c0_i32 = arith.constant 0 : i32
    return %arg0, %arg1 : i32, i32
  }
}

</mosaic_0001>

<llo_original>
// kernel: tpu_custom_call.1
$region0: #{tpu_custom_call.1}
  #allocation0 [shape = 'u32[]', space=smem, size = 0x4, offset = 0x4, fixed_abs, tag = 'smem constant byte address 0x4 - core index']
  #allocation1 [shape = 'u32[144,128]{1,0:T(1,128)}', space=vmem, size = 0x12000, scoped, tag = 'internal scratch']
  %s0 = inlined_call_operand.hbm [shape: f32[2,256], index: 0, kind: input, shape index: {}]
  %s1 = inlined_call_operand.vmem [shape: f32[1,256], index: 1, kind: input, shape index: {}]
  %s2 = inlined_call_operand.hbm [shape: f32[2,256], index: 2, kind: output, shape index: {}]
  %s3 = sld [smem:[#allocation0]]
  $region22: #{tpu_custom_call.1} parent=0
    _
  %s5 = ssub.s32 1, %s3
  %s6 = scalar_select 0, %s5, %s3
  $region1: #{tpu_custom_call.1} parent=0
    #allocation2 [shape = 'u8[2048]{0}', space=vmem, size = 0x800, scoped, tag = 'input window, operand 0, single buffered']
    #allocation3 [shape = 's32[1]{0}', space=sflag, size = 0x4, scoped, tag = 'scoped memory for tpu_custom_call.1']
    #allocation4 [shape = 's32[1]{0}', space=sflag, size = 0x4, scoped, tag = 'scoped memory for tpu_custom_call.1']
    #allocation5 [shape = 'u8[2048]{0}', space=vmem, size = 0x800, scoped, tag = 'output window, operand 0, single buffered']
    %7 = vsyncpa [#allocation3], 0
    %8 = vsyncpa [#allocation4], 0
    // Predicated region
    $region2: #{tpu_custom_call.1} parent=1 // pred_check
      _
    $region3: #{tpu_custom_call.1} parent=1 // pred_check_branch
      %10 = sbr.rel (0) target = $region5
    $region4: #{tpu_custom_call.1} parent=1 // pred_region
      %s12 = ssub.s32 64, 64
      %13 = vsyncadd [#allocation3], %s12
      %s15 = sshll.u32 [#allocation2], 4
      %s16 = int_to_ptr.vmem [resolvable:$true] %s15
      %18 = dma.hbm_to_vmem [thread:$0]  %s0, 64, %s16, [#allocation3]
    $region5: #{tpu_custom_call.1} parent=1 // pred_fallthru
      _
    // Predicated region
    $region6: #{tpu_custom_call.1} parent=1 // pred_check
      _
    $region7: #{tpu_custom_call.1} parent=1 // pred_check_branch
      %20 = sbr.rel (0) target = $region9
    $region8: #{tpu_custom_call.1} parent=1 // pred_region
      _
    $region9: #{tpu_custom_call.1} parent=1 // pred_fallthru
      _
    // Predicated region
    $region10: #{tpu_custom_call.1} parent=1 // pred_check
      _
    $region11: #{tpu_custom_call.1} parent=1 // pred_check_branch
      %22 = sbr.rel (0) target = $region13
    $region12: #{tpu_custom_call.1} parent=1 // pred_region
      %23 = dma.done [#allocation3], 64
    $region13: #{tpu_custom_call.1} parent=1 // pred_fallthru
      _
    %v24 = vld [vmem:[#allocation2] sm:$0xf]
    %v25 = vld [vmem:[%s1] sm:$0x3]
    %v27 = vlaneseq
    %v28 = vshrl.u32 %v27, 7
    %v29 = vsub.s32 0, %v28
    %v30 = vrot.slane %v25, %v29
    %v31 = vlaneseq
    %v32 = vshrl.u32 %v31, 7
    %v33 = vsub.s32 1, %v32
    %v34 = vrot.slane %v25, %v33
    %v35 = vcombine.low %v30, %v34
    %v37 = vunpack.c.l.s4 1983009808
    %v38 = vunpack.c.0.s8 %v37
    %v39 = vlaneseq
    %v40 = vshrl.u32 %v39, 7
    %v41 = vsub.s32 %v38, %v40
    %v42 = vrot.slane %v35, %v41
    %v44 = vadd.f32 %v24, %v42
    %45 = vst [vmem:[#allocation5] sm:$0xf] %v44
    // Predicated region
    $region14: #{tpu_custom_call.1} parent=1 // pred_check
      _
    $region15: #{tpu_custom_call.1} parent=1 // pred_check_branch
      %47 = sbr.rel (0) target = $region17
    $region16: #{tpu_custom_call.1} parent=1 // pred_region
      %s49 = ssub.s32 64, 64
      %50 = vsyncadd [#allocation4], %s49
      %s52 = sshll.u32 [#allocation5], 4
      %s53 = int_to_ptr.vmem [resolvable:$true] %s52
      %55 = dma.vmem_to_hbm [thread:$0]  %s53, 64, %s2, [#allocation4]
    $region17: #{tpu_custom_call.1} parent=1 // pred_fallthru
      _
    // Predicated region
    $region18: #{tpu_custom_call.1} parent=1 // pred_check
      _
    $region19: #{tpu_custom_call.1} parent=1 // pred_check_branch
      %57 = sbr.rel (0) target = $region21
    $region20: #{tpu_custom_call.1} parent=1 // pred_region
      %58 = dma.done [#allocation4], 64
    $region21: #{tpu_custom_call.1} parent=1 // pred_fallthru
      _
    %59 = vsyncpa [#allocation3], 1
    %60 = vsyncpa [#allocation4], 1

</llo_original>
